<compile_context>
chip_gen: v6e
topology: v6e:2x2x1
jax: 0.10.0
libtpu: 0.0.40
codegen_flags: <defaults>
</compile_context>

<pallas_src>
import functools

import jax
import jax.numpy as jnp
from jax import lax
from jax.experimental import pallas as pl
from jax.experimental.pallas import tpu as pltpu

_VMEM = pl.BlockSpec(memory_space=pltpu.MemorySpace.VMEM)


def _round_up(v, m):
    return (v + m - 1) // m * m


# ----------------------------------------------------------------------------
# Kernel 1: y = relu(x @ W + b)   (lin_a on nodes, lin_b on edges), row-tiled.
# ----------------------------------------------------------------------------
def _linear_relu_kernel(x_ref, w_ref, b_ref, o_ref):
    y = jnp.dot(x_ref[...], w_ref[...], preferred_element_type=jnp.float32)
    o_ref[...] = jnp.maximum(y + b_ref[...], 0.0)


def linear_relu(x, w, b, *, row_tile=512):
    rows, in_c = x.shape
    out_c = w.shape[1]
    tr = min(row_tile, _round_up(rows, 8))
    r_pad = _round_up(rows, tr)
    if r_pad != rows:
        x = jnp.pad(x, ((0, r_pad - rows), (0, 0)))
    y = pl.pallas_call(
        _linear_relu_kernel,
        out_shape=jax.ShapeDtypeStruct((r_pad, out_c), jnp.float32),
        grid_spec=pltpu.PrefetchScalarGridSpec(
            num_scalar_prefetch=0,
            grid=(r_pad // tr,),
            in_specs=[pl.BlockSpec((tr, in_c), lambda i: (i, 0)),
                      pl.BlockSpec((in_c, out_c), lambda i: (0, 0)),
                      pl.BlockSpec((1, out_c), lambda i: (0, 0))],
            out_specs=pl.BlockSpec((tr, out_c), lambda i: (i, 0))),
        compiler_params=pltpu.CompilerParams(
            dimension_semantics=("parallel",)),
    )(x, w, b.reshape(1, -1))
    return y[:rows]


# ----------------------------------------------------------------------------
# Kernel 2: ALL NTNConv layers fused.  Grid = (num_layers, edge_tiles).
#   message:  max(x_j, ew) * tanh(bilinear(x_i, x_j) + linear([x_i, ew, x_j]))
#   aggregate: scatter-add onto dst nodes (VMEM f32 accumulator)
#   update:    h = relu(agg); beta = sigmoid(lin_gate([x, h, x-h]));
#              x <- beta * x + (1 - beta) * h      (x carried in VMEM scratch)
# ----------------------------------------------------------------------------
def _gnn_conv_kernel(slices, x0_ref, ea_ref, ssrc_ref, sdst_ref,
                     wnode_ref, wedge_ref, wbil_ref, wlin_ref, blin_ref,
                     wgate_ref, bgate_ref, rep_ref, bsel_ref,
                     xout_ref, x_state, xw_bf, agg):
    hp = x0_ref.shape[1]
    l = pl.program_id(0)
    e = pl.program_id(1)
    n_l = pl.num_programs(0)
    n_e = pl.num_programs(1)
    dot = functools.partial(jnp.dot, preferred_element_type=jnp.float32)

    # bring the initial node embedding into the VMEM-resident state once
    @pl.when(jnp.logical_and(l == 0, e == 0))
    def _():
        x_state[...] = x0_ref[...]

    # per-layer init: x @ weight_node computed once, cached in bf16 for the
    # bf16 MXU gathers; zero the scatter-add accumulator.
    @pl.when(e == 0)
    def _():
        xw_bf[...] = dot(x_state[...], wnode_ref[0]).astype(jnp.bfloat16)
        agg[...] = jnp.zeros_like(agg)

    # -------- message phase for this edge tile --------
    xw = xw_bf[...]
    sd = sdst_ref[...]                                 # (TE, N) bf16 one-hot
    x_i = dot(sd, xw)                                  # (TE, Hp) gather dst, f32 acc
    x_j = dot(ssrc_ref[...], xw)                       # (TE, Hp) gather src
    ew = dot(ea_ref[...], wedge_ref[0])                # (TE, Hp)

    # bilinear (NTN) score as one MXU push:
    #   T[e, s*Hp+b] = sum_a x_i[e,a] * W_bil[s,a,b];  score = sum_b T * x_j
    t = dot(x_i, wbil_ref[0])                          # (TE, S*Hp)
    x_j_rep = jnp.concatenate([x_j] * slices, axis=1)  # (TE, S*Hp)
    score = dot(t * x_j_rep, bsel_ref[...])            # (TE, S)

    # linear block score on cat([x_i, ew, x_j]) without materializing the cat
    wl = wlin_ref[0]
    block_score = (dot(x_i, wl[0:hp]) + dot(ew, wl[hp:2 * hp])
                   + dot(x_j, wl[2 * hp:3 * hp]) + blin_ref[0])

    alpha = jnp.tanh(score + block_score)              # (TE, S)
    # F.dropout(alpha, training=False) -> identity (eval mode)
    alpha_full = dot(alpha, rep_ref[...])              # (TE, Hp) slice broadcast
    msg = (jnp.maximum(x_j, ew) * alpha_full).astype(jnp.bfloat16)

    # scatter-add onto target nodes: contract the edge axis of s_dst directly
    # (transposed-A matmul) -> no (N, E) transposed copy in HBM/VMEM.
    agg[...] += lax.dot_general(sd, msg, (((0,), (0,)), ((), ())),
                                preferred_element_type=jnp.float32)

    # -------- layer finalize: relu + gated residual update --------
    @pl.when(e == n_e - 1)
    def _():
        x = x_state[...]
        h = jnp.maximum(agg[...], 0.0)
        wg = wgate_ref[...]
        gate = (dot(x, wg[0:hp]) + dot(h, wg[hp:2 * hp])
                + dot(x - h, wg[2 * hp:3 * hp]) + bgate_ref[...])
        beta = jax.nn.sigmoid(gate)
        x_state[...] = beta * x + (1.0 - beta) * h

    @pl.when(jnp.logical_and(e == n_e - 1, l == n_l - 1))
    def _():
        xout_ref[...] = x_state[...]


def gnn_convs(x0, ea, s_src, s_dst, prep, slices, edge_tile):
    n_pad, hp = x0.shape
    e_pad = ea.shape[0]
    n_layers = prep['w_node'].shape[0]
    n_et = e_pad // edge_tile
    s = slices

    layer_map = lambda l, e: (l, 0, 0)
    node_map = lambda l, e: (0, 0)
    edge_map = lambda l, e: (e, 0)

    flops = 2 * n_layers * (
        n_pad * hp * hp + 2 * e_pad * n_pad * hp + e_pad * hp * hp
        + e_pad * hp * s * hp + e_pad * s * hp * s + e_pad * 3 * hp * s
        + e_pad * s * hp + e_pad * n_pad * hp + 3 * n_pad * hp * hp)
    bytes_accessed = (n_layers * (2 * 2 * e_pad * n_pad + 4 * e_pad * hp
                                  + 4 * (2 * hp * hp + hp * s * hp + 3 * hp * s))
                      + 4 * 2 * n_pad * hp + 4 * (3 * hp * hp + hp))
    cost = pl.CostEstimate(flops=flops,
                           transcendentals=n_layers * (e_pad * s + n_pad * hp),
                           bytes_accessed=bytes_accessed)

    return pl.pallas_call(
        functools.partial(_gnn_conv_kernel, slices),
        out_shape=jax.ShapeDtypeStruct((n_pad, hp), jnp.float32),
        grid_spec=pltpu.PrefetchScalarGridSpec(
            num_scalar_prefetch=0,
            grid=(n_layers, n_et),
            in_specs=[
                pl.BlockSpec((n_pad, hp), node_map),          # x0 (after lin_a)
                pl.BlockSpec((edge_tile, hp), edge_map),      # ea (after lin_b)
                pl.BlockSpec((edge_tile, n_pad), edge_map),   # s_src  (bf16 one-hot)
                pl.BlockSpec((edge_tile, n_pad), edge_map),   # s_dst  (bf16 one-hot)
                pl.BlockSpec((1, hp, hp), layer_map),         # weight_node[l]
                pl.BlockSpec((1, hp, hp), layer_map),         # weight_edge[l]
                pl.BlockSpec((1, hp, s * hp), layer_map),     # bilinear (flattened)[l]
                pl.BlockSpec((1, 3 * hp, s), layer_map),      # linear weight[l]
                pl.BlockSpec((1, 1, s), layer_map),           # linear bias[l]
                pl.BlockSpec((3 * hp, hp), node_map),         # lin_gate weight
                pl.BlockSpec((1, hp), node_map),              # lin_gate bias
                pl.BlockSpec((s, hp), node_map),              # slice-broadcast selector
                pl.BlockSpec((s * hp, s), node_map),          # bilinear reduce selector
            ],
            out_specs=pl.BlockSpec((n_pad, hp), node_map),
            scratch_shapes=[
                pltpu.VMEM((n_pad, hp), jnp.float32),   # x_state (carried over layers)
                pltpu.VMEM((n_pad, hp), jnp.bfloat16),  # x @ weight_node cache
                pltpu.VMEM((n_pad, hp), jnp.float32),   # scatter-add accumulator
            ]),
        compiler_params=pltpu.CompilerParams(
            # layer axis carries state, edge axis is a reduction -> both sequential
            dimension_semantics=("arbitrary", "arbitrary"),
            vmem_limit_bytes=48 * 1024 * 1024),
        cost_estimate=cost,
    )(x0, ea, s_src, s_dst,
      prep['w_node'], prep['w_edge'], prep['w_bil'], prep['w_lin'], prep['b_lin'],
      prep['gate_w'], prep['gate_b'], prep['rep'], prep['bsel'])


# ----------------------------------------------------------------------------
# Kernel 3: global_add_pool + relu + final Linear
# ----------------------------------------------------------------------------
def _pool_out_kernel(x_ref, bmat_t_ref, wout_ref, bout_ref, o_ref):
    mol = jnp.dot(bmat_t_ref[...], x_ref[...],
                  preferred_element_type=jnp.float32)   # (G, Hp) add-pool
    mol = jnp.maximum(mol, 0.0)                         # .relu_()
    # F.dropout(training=False) -> identity
    o_ref[...] = jnp.dot(mol, wout_ref[...],
                         preferred_element_type=jnp.float32) + bout_ref[...]


def pool_out(x, b_mat_t, w_out, b_out):
    g, o = b_mat_t.shape[0], w_out.shape[1]
    return pl.pallas_call(
        _pool_out_kernel,
        out_shape=jax.ShapeDtypeStruct((g, o), jnp.float32),
        in_specs=[_VMEM] * 4,
        out_specs=_VMEM,
    )(x, b_mat_t, w_out, b_out)


# ----------------------------------------------------------------------------
# Host-side parameter preparation: pad hidden to lane-dense width, flatten the
# bilinear tensor, stack per-layer weights, precompute selector constants.
# ----------------------------------------------------------------------------
def _prepare_params(params, slices, hp):
    H = params['lin_gate_w'].shape[1]
    S = slices
    ds = H // S

    def pad(a, shape):
        return jnp.pad(a, [(0, t - d) for d, t in zip(a.shape, shape)])

    def pad_cat_rows(w, n_blocks, cols_out):
        # (n_blocks*H, cols) -> (n_blocks*hp, cols_out); each H-block lands at k*hp
        return jnp.concatenate(
            [pad(w[k * H:(k + 1) * H], (hp, cols_out)) for k in range(n_blocks)],
            axis=0)

    convs = params['convs']
    out_c = params['out_w'].shape[1]
    prep = {
        'lin_a_w': pad(params['lin_a_w'], (params['lin_a_w'].shape[0], hp)),
        'lin_a_b': pad(params['lin_a_b'], (hp,)),
        'lin_b_w': pad(params['lin_b_w'], (params['lin_b_w'].shape[0], hp)),
        'lin_b_b': pad(params['lin_b_b'], (hp,)),
        'w_node': jnp.stack([pad(c['w_node'], (hp, hp)) for c in convs]),
        'w_edge': jnp.stack([pad(c['w_edge'], (hp, hp)) for c in convs]),
        # (S, H, H) -> zero-pad -> (Hp, S*Hp) so the bilinear is ONE matmul
        'w_bil': jnp.stack([pad(c['w_bil'], (S, hp, hp))
                            .transpose(1, 0, 2).reshape(hp, S * hp) for c in convs]),
        'w_lin': jnp.stack([pad_cat_rows(c['w_lin'], 3, S) for c in convs]),
        'b_lin': jnp.stack([c['b_lin'].reshape(1, S) for c in convs]),
        'gate_w': pad_cat_rows(params['lin_gate_w'], 3, hp),
        'gate_b': pad(params['lin_gate_b'], (hp,)).reshape(1, hp),
        'out_w': pad(params['out_w'], (hp, out_c)),
        'out_b': params['out_b'].reshape(1, -1),
    }
    # slice-broadcast selector (S, Hp): alpha[:, s] -> channels [s*ds, (s+1)*ds)
    col = jnp.arange(hp)
    prep['rep'] = ((col[None, :] // ds == jnp.arange(S)[:, None])
                   & (col[None, :] < H)).astype(jnp.float32)
    # bilinear slice-group reduction selector (S*Hp, S)
    k = jnp.arange(S * hp)
    prep['bsel'] = (k[:, None] // hp == jnp.arange(S)[None, :]).astype(jnp.float32)
    return prep


# ----------------------------------------------------------------------------
# Parameter init (deterministic, synthetic) + full forward
# ----------------------------------------------------------------------------
def init_params(key, in_c, hid, out_c, edge_dim, num_layers, slices):
    keys = iter(jax.random.split(key, 8 + 6 * num_layers))

    def w(shape):
        return (shape[0] ** -0.5) * jax.random.normal(next(keys), shape, jnp.float32)

    def b(shape):
        return 0.01 * jax.random.normal(next(keys), shape, jnp.float32)

    convs = []
    for _ in range(num_layers):
        convs.append({
            'w_node': w((hid, hid)),
            'w_edge': w((hid, hid)),
            'w_bil': (hid ** -1.0) * jax.random.normal(next(keys), (slices, hid, hid), jnp.float32),
            'w_lin': w((3 * hid, slices)),
            'b_lin': b((slices,)),
        })
    return {
        'lin_a_w': w((in_c, hid)), 'lin_a_b': b((hid,)),
        'lin_b_w': w((edge_dim, hid)), 'lin_b_b': b((hid,)),
        'convs': convs,
        'lin_gate_w': w((3 * hid, hid)), 'lin_gate_b': b((hid,)),
        'out_w': w((hid, out_c)), 'out_b': b((out_c,)),
    }


def custom_gnn_forward(params, x, edge_attr, src, dst, batch, num_graphs, slices,
                       *, edge_tile=256):
    H = params['lin_gate_w'].shape[1]
    assert H % slices == 0, "hidden_channels must be divisible by slices"
    hp = _round_up(max(H, 128), 128)           # lane-dense hidden width
    N, E = x.shape[0], edge_attr.shape[0]
    n_pad = _round_up(N, 8)
    te = min(edge_tile, _round_up(E, 8))
    e_pad = _round_up(E, te)

    prep = _prepare_params(params, slices, hp)

    # Padded nodes/edges are never selected by the (exact) bf16 one-hot
    # gather/scatter operators, so they cannot affect real outputs.
    x_in = jnp.pad(x, ((0, n_pad - N), (0, 0)))
    ea_in = jnp.pad(edge_attr, ((0, e_pad - E), (0, 0)))
    node_ids = jnp.arange(n_pad)
    s_src = jnp.pad((src[:, None] == node_ids[None, :]).astype(jnp.bfloat16),
                    ((0, e_pad - E), (0, 0)))                      # (E_pad, N_pad)
    s_dst = jnp.pad((dst[:, None] == node_ids[None, :]).astype(jnp.bfloat16),
                    ((0, e_pad - E), (0, 0)))                      # (E_pad, N_pad)
    b_mat_t = jnp.pad(jax.nn.one_hot(batch, num_graphs, dtype=jnp.float32),
                      ((0, n_pad - N), (0, 0))).T                  # (G, N_pad)

    x0 = linear_relu(x_in, prep['lin_a_w'], prep['lin_a_b'])
    ea = linear_relu(ea_in, prep['lin_b_w'], prep['lin_b_b'])
    x_final = gnn_convs(x0, ea, s_src, s_dst, prep, slices, te)
    # TODO(synk): FeatureAttention (f_att=True) is not on the default forward
    # path and is not implemented here.
    return pool_out(x_final, b_mat_t, prep['out_w'], prep['out_b'])


# ----------------------------------------------------------------------------
# Pure-JAX reference (real gather / segment_sum), for numerical check
# ----------------------------------------------------------------------------
def reference_forward(params, x, edge_attr, edge_index, batch, num_graphs, slices):
    def lin_relu(v, w, b):
        return jax.nn.relu(v @ w + b)

    x = lin_relu(x, params['lin_a_w'], params['lin_a_b'])
    ea0 = lin_relu(edge_attr, params['lin_b_w'], params['lin_b_b'])
    src, dst = edge_index[0], edge_index[1]
    n, h = x.shape
    ds = h // slices
    for layer in params['convs']:
        xw = x @ layer['w_node']
        ew = ea0 @ layer['w_edge']
        x_i, x_j = xw[dst], xw[src]
        score = jnp.einsum('ea,sab,eb->es', x_i, layer['w_bil'], x_j)
        vec = jnp.concatenate([x_i, ew, x_j], axis=1)
        block = vec @ layer['w_lin'] + layer['b_lin']
        alpha = jnp.tanh(score + block)
        msg = (jnp.maximum(x_j, ew).reshape(-1, slices, ds)
               * alpha[:, :, None]).reshape(-1, h)
        agg = jax.ops.segment_sum(msg, dst, num_segments=n)
        hh = jax.nn.relu(agg)
        gate_in = jnp.concatenate([x, hh, x - hh], axis=1)
        beta = jax.nn.sigmoid(gate_in @ params['lin_gate_w'] + params['lin_gate_b'])
        x = beta * x + (1.0 - beta) * hh
    mol = jax.nn.relu(jax.ops.segment_sum(x, batch, num_segments=num_graphs))
    return mol @ params['out_w'] + params['out_b']


if __name__ == "__main__":
    # small synthetic graph batch
    N, E, G = 16, 32, 2                       # nodes, edges, graphs
    IN_C, EDGE_DIM, HID, OUT_C = 8, 6, 32, 4
    NUM_LAYERS, SLICES = 2, 4                 # HID % SLICES == 0
    # dropout p=0.1 but model run in eval mode -> identity

    key = jax.random.PRNGKey(0)
    keys = jax.random.split(key, 6)
    x = jax.random.normal(keys[0], (N, IN_C), jnp.float32)
    edge_attr = jax.random.normal(keys[1], (E, EDGE_DIM), jnp.float32)
    src = jax.random.randint(keys[2], (E,), 0, N)
    dst = jax.random.randint(keys[3], (E,), 0, N)
    edge_index = jnp.stack([src, dst])
    batch = jnp.concatenate([jnp.zeros(N // 2, jnp.int32),
                             jnp.ones(N - N // 2, jnp.int32)])

    params = init_params(keys[4], IN_C, HID, OUT_C, EDGE_DIM, NUM_LAYERS, SLICES)

    out = custom_gnn_forward(params, x, edge_attr, src, dst, batch, G, SLICES)
    out = jax.block_until_ready(out)

    ref = reference_forward(params, x, edge_attr, edge_index, batch, G, SLICES)
    err = float(jnp.max(jnp.abs(out - ref)))
    scale = float(jnp.max(jnp.abs(ref))) + 1.0

    assert out.shape == (G, OUT_C), out.shape
    assert bool(jnp.all(jnp.isfinite(out)))
    assert err < 5e-2 * scale, f"mismatch vs reference: {err}"
    print("KERNEL_OK")
</pallas_src>

<mosaic_0001>
module attributes {stable_mosaic.version = 11 : i64} {
  func.func @_linear_relu_kernel(%arg0: i32, %arg1: memref<16x8xf32, #tpu.memory_space<vmem>>, %arg2: memref<8x128xf32, #tpu.memory_space<vmem>>, %arg3: memref<1x128xf32, #tpu.memory_space<vmem>>, %arg4: memref<16x128xf32, #tpu.memory_space<vmem>>) attributes {dimension_semantics = [#tpu.dimension_semantics<parallel>], iteration_bounds = array<i64: 1>, scalar_prefetch = 0 : i64, scratch_operands = 0 : i64, tpu.core_type = #tpu.core_type<tc>, window_params = [{transform_indices = @transform_0, window_bounds = array<i64: 16, 8>}, {pipeline_mode = #tpu.pipeline_mode<synchronous>, transform_indices = @transform_1, window_bounds = array<i64: 8, 128>}, {pipeline_mode = #tpu.pipeline_mode<synchronous>, transform_indices = @transform_2, window_bounds = array<i64: 1, 128>}, {transform_indices = @transform_3, window_bounds = array<i64: 16, 128>}]} {
    %c0 = arith.constant 0 : index
    %c0_0 = arith.constant 0 : index
    %0 = vector.load %arg1[%c0, %c0_0] : memref<16x8xf32, #tpu.memory_space<vmem>>, vector<16x8xf32>
    %c0_1 = arith.constant 0 : index
    %c0_2 = arith.constant 0 : index
    %1 = vector.load %arg2[%c0_1, %c0_2] : memref<8x128xf32, #tpu.memory_space<vmem>>, vector<8x128xf32>
    %cst = arith.constant dense<0.000000e+00> : vector<16x128xf32>
    %2 = tpu.matmul %0, %1, %cst {dimension_numbers = #tpu.dot_dimension_numbers<[1], [0], [0], [1], [0, 0, 1, 1], [], []>} : vector<16x8xf32>, vector<8x128xf32>, vector<16x128xf32> -> vector<16x128xf32>
    %c0_3 = arith.constant 0 : index
    %c0_4 = arith.constant 0 : index
    %3 = vector.load %arg3[%c0_3, %c0_4] : memref<1x128xf32, #tpu.memory_space<vmem>>, vector<1x128xf32>
    %4 = vector.broadcast %3 : vector<1x128xf32> to vector<16x128xf32>
    %5 = arith.addf %2, %4 : vector<16x128xf32>
    %cst_5 = arith.constant 0.000000e+00 : f32
    %6 = vector.broadcast %cst_5 : f32 to vector<16x128xf32>
    %7 = arith.maximumf %5, %6 : vector<16x128xf32>
    %c0_6 = arith.constant 0 : index
    %c0_7 = arith.constant 0 : index
    %8 = vector.load %arg4[%c0_6, %c0_7] : memref<16x128xf32, #tpu.memory_space<vmem>>, vector<16x128xf32>
    tpu.vector_store %arg4[%c0_6, %c0_7], %7 {strides = array<i32>} : memref<16x128xf32, #tpu.memory_space<vmem>>, vector<16x128xf32>,
    return
  }
  func.func @transform_0(%arg0: i32) -> (i32, i32) {
    %c0_i32 = arith.constant 0 : i32
    %c0_i32_0 = arith.constant 0 : i32
    return %arg0, %c0_i32 : i32, i32
  }
  func.func @transform_1(%arg0: i32) -> (i32, i32) {
    %c0_i32 = arith.constant 0 : i32
    %c0_i32_0 = arith.constant 0 : i32
    %c0_i32_1 = arith.constant 0 : i32
    return %c0_i32, %c0_i32_0 : i32, i32
  }
  func.func @transform_2(%arg0: i32) -> (i32, i32) {
    %c0_i32 = arith.constant 0 : i32
    %c0_i32_0 = arith.constant 0 : i32
    %c0_i32_1 = arith.constant 0 : i32
    return %c0_i32, %c0_i32_0 : i32, i32
  }
  func.func @transform_3(%arg0: i32) -> (i32, i32) {
    %c0_i32 = arith.constant 0 : i32
    %c0_i32_0 = arith.constant 0 : i32
    return %arg0, %c0_i32 : i32, i32
  }
}

</mosaic_0001>

<llo_original>
// kernel: tpu_custom_call.1
$region0: #{tpu_custom_call.1}
  #allocation0 [shape = 'u32[]', space=smem, size = 0x4, offset = 0x4, fixed_abs, tag = 'smem constant byte address 0x4 - core index']
  #allocation1 [shape = 'u32[144,128]{1,0:T(1,128)}', space=vmem, size = 0x12000, scoped, tag = 'internal scratch']
  %s0 = inlined_call_operand.vmem [shape: f32[16,8], index: 0, kind: input, shape index: {}]
  %s1 = inlined_call_operand.vmem [shape: f32[8,128], index: 1, kind: input, shape index: {}]
  %s2 = inlined_call_operand.vmem [shape: f32[1,128], index: 2, kind: input, shape index: {}]
  %s3 = inlined_call_operand.hbm [shape: f32[16,128], index: 3, kind: output, shape index: {}]
  %s4 = sld [smem:[#allocation0]]
  $region22: #{tpu_custom_call.1} parent=0
    _
  %s6 = ssub.s32 1, %s4
  %s7 = scalar_select 0, %s6, %s4
  $region1: #{tpu_custom_call.1} parent=0
    #allocation2 [shape = 'u8[8192]{0}', space=vmem, size = 0x2000, scoped, tag = 'output window, operand 0, single buffered']
    #allocation3 [shape = 's32[1]{0}', space=sflag, size = 0x4, scoped, tag = 'scoped memory for tpu_custom_call.1']
    %8 = vsyncpa [#allocation3], 0
    // Predicated region
    $region2: #{tpu_custom_call.1} parent=1 // pred_check
      _
    $region3: #{tpu_custom_call.1} parent=1 // pred_check_branch
      %10 = sbr.rel (0) target = $region5
    $region4: #{tpu_custom_call.1} parent=1 // pred_region
      _
    $region5: #{tpu_custom_call.1} parent=1 // pred_fallthru
      _
    // Predicated region
    $region6: #{tpu_custom_call.1} parent=1 // pred_check
      _
    $region7: #{tpu_custom_call.1} parent=1 // pred_check_branch
      %12 = sbr.rel (0) target = $region9
    $region8: #{tpu_custom_call.1} parent=1 // pred_region
      _
    $region9: #{tpu_custom_call.1} parent=1 // pred_fallthru
      _
    // Predicated region
    $region10: #{tpu_custom_call.1} parent=1 // pred_check
      _
    $region11: #{tpu_custom_call.1} parent=1 // pred_check_branch
      %14 = sbr.rel (0) target = $region13
    $region12: #{tpu_custom_call.1} parent=1 // pred_region
      _
    $region13: #{tpu_custom_call.1} parent=1 // pred_fallthru
      _
    %v15 = vld [vmem:[%s0] sm:$0xff]
    %v16 = vld [vmem:[%s0 + $0x8] sm:$0xff]
    %v17 = vld [vmem:[%s1] sm:$0xff]
    %v18 = vld [vmem:[%s2] sm:$0x1]
    %v20 = vlaneseq
    %v21 = vshrl.u32 %v20, 7
    %v22 = vsub.s32 0, %v21
    %v23 = vrot.slane %v18, %v22
    %vm25 = vcmask 64512
    %v27 = vsel %vm25, %v15, 0
    %v30 = vsel %vm25, %v16, 0
    %32 = vmatprep.subr.mxu0 0.0
    %33 = vmatpush1.msra.mxu0 0.0
    %34 = vmatprep.subr.mxu0 0.0
    %35 = vmatpush1.msra.mxu0 0.0
    %36 = vmatprep.subr.mxu0 0.0
    %37 = vmatpush1.msra.mxu0 0.0
    %38 = vmatprep.subr.mxu0 0.0
    %39 = vmatpush1.msra.mxu0 0.0
    %40 = vmatprep.subr.mxu0 0.0
    %41 = vmatpush1.msra.mxu0 0.0
    %42 = vmatprep.subr.mxu0 0.0
    %43 = vmatpush1.msra.mxu0 0.0
    %44 = vmatprep.subr.mxu0 0.0
    %45 = vmatpush1.msra.mxu0 0.0
    %46 = vmatprep.subr.mxu0 0.0
    %47 = vmatpush1.msra.mxu0 0.0
    %48 = vmatprep.subr.mxu0 0.0
    %49 = vmatpush1.msra.mxu0 0.0
    %50 = vmatprep.subr.mxu0 0.0
    %51 = vmatpush1.msra.mxu0 0.0
    %52 = vmatprep.subr.mxu0 0.0
    %53 = vmatpush1.msra.mxu0 0.0
    %54 = vmatprep.subr.mxu0 0.0
    %55 = vmatpush1.msra.mxu0 0.0
    %56 = vmatprep.subr.mxu0 0.0
    %57 = vmatpush1.msra.mxu0 0.0
    %58 = vmatprep.subr.mxu0 0.0
    %59 = vmatpush1.msra.mxu0 0.0
    %60 = vmatprep.subr.mxu0 0.0
    %61 = vmatpush1.msra.mxu0 0.0
    %62 = vmatprep.subr.mxu0 0.0
    %63 = vmatpush1.msra.mxu0 %v17
    %64 = vmatprep.subr.mxu0 0.0
    %65 = vmatpush2.msra.mxu0 0.0
    %66 = vmatprep.subr.mxu0 0.0
    %67 = vmatpush2.msra.mxu0 0.0
    %68 = vmatprep.subr.mxu0 0.0
    %69 = vmatpush2.msra.mxu0 0.0
    %70 = vmatprep.subr.mxu0 0.0
    %71 = vmatpush2.msra.mxu0 0.0
    %72 = vmatprep.subr.mxu0 0.0
    %73 = vmatpush2.msra.mxu0 0.0
    %74 = vmatprep.subr.mxu0 0.0
    %75 = vmatpush2.msra.mxu0 0.0
    %76 = vmatprep.subr.mxu0 0.0
    %77 = vmatpush2.msra.mxu0 0.0
    %78 = vmatprep.subr.mxu0 0.0
    %79 = vmatpush2.msra.mxu0 0.0
    %80 = vmatprep.subr.mxu0 0.0
    %81 = vmatpush2.msra.mxu0 0.0
    %82 = vmatprep.subr.mxu0 0.0
    %83 = vmatpush2.msra.mxu0 0.0
    %84 = vmatprep.subr.mxu0 0.0
    %85 = vmatpush2.msra.mxu0 0.0
    %86 = vmatprep.subr.mxu0 0.0
    %87 = vmatpush2.msra.mxu0 0.0
    %88 = vmatprep.subr.mxu0 0.0
    %89 = vmatpush2.msra.mxu0 0.0
    %90 = vmatprep.subr.mxu0 0.0
    %91 = vmatpush2.msra.mxu0 0.0
    %92 = vmatprep.subr.mxu0 0.0
    %93 = vmatpush2.msra.mxu0 0.0
    %94 = vmatprep.subr.mxu0 0.0
    %95 = vmatpush2.msra.mxu0 0.0
    %96 = vmatprep.mubr.f32.mxu0 0.0
    %97 = vmatmul.mubr.f32.gmra.mxu0 %v27
    %v98 = vpop.f32.mrf.mxu0
    %v99 = vadd.f32 %v23, %v98
    %v100 = vpop.f32.mrf.mxu0
    %101 = vmatprep.mubr.f32.mxu0 0.0
    %102 = vmatmul.mubr.f32.gmra.mxu0 %v30
    %v103 = vpop.f32.mrf.mxu0
    %v104 = vadd.f32 %v23, %v103
    %v105 = vpop.f32.mrf.mxu0
    %106 = vdwg.mxu0
    %v107 = vmax.f32 %v99, 0.0
    %v108 = vmax.f32 %v104, 0.0
    %109 = vst [vmem:[#allocation2] sm:$0xff] %v107
    %110 = vst [vmem:[#allocation2 + $0x8] sm:$0xff] %v108
    // Predicated region
    $region14: #{tpu_custom_call.1} parent=1 // pred_check
      _
    $region15: #{tpu_custom_call.1} parent=1 // pred_check_branch
      %112 = sbr.rel (0) target = $region17
    $region16: #{tpu_custom_call.1} parent=1 // pred_region
      %s114 = ssub.s32 256, 256
      %115 = vsyncadd [#allocation3], %s114
      %s116 = sshll.u32 [#allocation2], 4
      %s117 = int_to_ptr.vmem [resolvable:$true] %s116
      %122 = dma.vmem_to_hbm [thread:$0]  %s117, 256, %s3, [#allocation3], 128, 128, 8
    $region17: #{tpu_custom_call.1} parent=1 // pred_fallthru
      _
    // Predicated region
    $region18: #{tpu_custom_call.1} parent=1 // pred_check
      _
    $region19: #{tpu_custom_call.1} parent=1 // pred_check_branch
      %124 = sbr.rel (0) target = $region21
    $region20: #{tpu_custom_call.1} parent=1 // pred_region
      %125 = dma.done [#allocation3], 256
    $region21: #{tpu_custom_call.1} parent=1 // pred_fallthru
      _
    %126 = vsyncpa [#allocation3], 1

</llo_original>
